<compile_context>
chip_gen: v7x
topology: tpu7x:2x2x1
jax: 0.10.0
libtpu: 0.0.40
codegen_flags: <defaults>
</compile_context>

<pallas_src>
import jax
import jax.numpy as jnp
from jax.experimental import pallas as pl
from jax.experimental.pallas import tpu as pltpu

_LANE = 128
_SUBLANE = 8


def _round_up(v, mult):
    return ((v + mult - 1) // mult) * mult


def _make_kernel(n_flows, half_p, resident_weights, store_all_z):
    """Build the fused-flows kernel body.

    Grid point (i, f): batch tile i, flow f (flow axis innermost, "arbitrary").
    cond_scr / tgt_scr are role-based f32 carries: the conditioner / target
    halves for the CURRENT flow. s_acc accumulates s full-width for log_det.
    """

    def kernel(x_ref, w1_ref, b1_ref, w2_ref, b2_ref,
               z_ref, ld_ref, cond_scr, tgt_scr, s_acc):
        f = pl.program_id(1)
        is_swap = (f % 2) == 1          # flow parity: which physical half is which

        @pl.when(f == 0)
        def _init():
            # Flow 0 conditions on the first half, transforms the second half.
            cond_scr[...] = x_ref[:, :half_p].astype(jnp.float32)
            tgt_scr[...] = x_ref[:, half_p:].astype(jnp.float32)
            s_acc[...] = jnp.zeros_like(s_acc)

        if resident_weights:
            w1, b1 = w1_ref[f], b1_ref[f]
            w2, b2 = w2_ref[f], b2_ref[f]
        else:
            w1, b1 = w1_ref[...], b1_ref[...]
            w2, b2 = w2_ref[...], b2_ref[...]

        cond = cond_scr[...]            # (tile_m, half_p) f32, untouched half
        target = tgt_scr[...]           # (tile_m, half_p) f32, transformed half

        # MLP: bf16 MXU matmuls with f32 accumulation; tanh/exp in f32.
        h = jnp.tanh(
            jnp.dot(cond.astype(w1.dtype), w1,
                    preferred_element_type=jnp.float32)
            + b1.astype(jnp.float32))
        st = (jnp.dot(h.astype(w2.dtype), w2,
                      preferred_element_type=jnp.float32)
              + b2.astype(jnp.float32))           # (tile_m, 2*half_p) = [s | t]
        s = st[:, :half_p]                        # 128-aligned slices
        t = st[:, half_p:]

        out = target * jnp.exp(s) + t

        # Role swap for the next flow: the freshly transformed half conditions
        # the next flow; the current conditioner becomes the next target.
        cond_scr[...] = out
        tgt_scr[...] = cond
        s_acc[...] = s_acc[...] + s

        def _store_z():
            out_st = out.astype(z_ref.dtype)
            cond_st = cond.astype(z_ref.dtype)

            @pl.when((f % 2) == 0)                # no swap: z = [cond | out]
            def _():
                z_ref[:, :half_p] = cond_st
                z_ref[:, half_p:] = out_st

            @pl.when(is_swap)                     # swap: z = [out | cond]
            def _():
                z_ref[:, :half_p] = out_st
                z_ref[:, half_p:] = cond_st

        if store_all_z:
            _store_z()
        else:
            pl.when(f == n_flows - 1)(_store_z)

        @pl.when(f == n_flows - 1)
        def _finalize():
            ld_ref[...] = jnp.sum(s_acc[...], axis=1, keepdims=True)

    return kernel


def _fused_flows(xp, w1, b1, w2, b2, *, tile_m, store_all_z):
    m_p, d_p = xp.shape
    half_p = d_p // 2
    n_flows, _, hidden_p = w1.shape
    n_tiles = m_p // tile_m
    store_dtype = xp.dtype
    itemsize = jnp.dtype(store_dtype).itemsize

    weight_bytes = int(w1.size + b1.size + w2.size + b2.size) * itemsize
    resident = weight_bytes <= 4 * 1024 * 1024    # keep all flows' weights in VMEM

    if resident:
        w_idx = lambda i, f: (0, 0, 0)            # fetched once, VMEM-resident
        w1_spec = pl.BlockSpec((n_flows, half_p, hidden_p), w_idx)
        b1_spec = pl.BlockSpec((n_flows, 1, hidden_p), w_idx)
        w2_spec = pl.BlockSpec((n_flows, hidden_p, d_p), w_idx)
        b2_spec = pl.BlockSpec((n_flows, 1, d_p), w_idx)
    else:
        w_idx = lambda i, f: (f, 0, 0)            # streamed per flow (pipelined)
        w1_spec = pl.BlockSpec((None, half_p, hidden_p), w_idx)
        b1_spec = pl.BlockSpec((None, 1, hidden_p), w_idx)
        w2_spec = pl.BlockSpec((None, hidden_p, d_p), w_idx)
        b2_spec = pl.BlockSpec((None, 1, d_p), w_idx)

    x_spec = pl.BlockSpec((tile_m, d_p), lambda i, f: (i, 0))        # resident over f
    n_z = n_flows if store_all_z else 1
    z_spec = pl.BlockSpec((None, tile_m, d_p),
                          (lambda i, f: (f, i, 0)) if store_all_z
                          else (lambda i, f: (0, i, 0)))
    ld_spec = pl.BlockSpec((tile_m, 1), lambda i, f: (i, 0))         # written at last f

    cost = pl.CostEstimate(
        flops=6 * n_flows * m_p * half_p * hidden_p,
        transcendentals=n_flows * m_p * (hidden_p + half_p),
        bytes_accessed=(m_p * d_p * itemsize            # x read (once per tile)
                        + weight_bytes                  # weights
                        + n_z * m_p * d_p * itemsize    # z writes
                        + m_p * 4),                     # log_det
    )

    kernel = _make_kernel(n_flows, half_p, resident, store_all_z)

    z, ld = pl.pallas_call(
        kernel,
        out_shape=(jax.ShapeDtypeStruct((n_z, m_p, d_p), store_dtype),
                   jax.ShapeDtypeStruct((m_p, 1), jnp.float32)),
        grid=(n_tiles, n_flows),
        in_specs=[x_spec, w1_spec, b1_spec, w2_spec, b2_spec],
        out_specs=(z_spec, ld_spec),
        scratch_shapes=[pltpu.VMEM((tile_m, half_p), jnp.float32),   # conditioner carry
                        pltpu.VMEM((tile_m, half_p), jnp.float32),   # target carry
                        pltpu.VMEM((tile_m, half_p), jnp.float32)],  # s accumulator
        compiler_params=pltpu.CompilerParams(
            dimension_semantics=("parallel", "arbitrary"),
            vmem_limit_bytes=32 * 1024 * 1024),          # safe on v7x's 64 MiB VMEM
        cost_estimate=cost,
    )(xp, w1, b1, w2, b2)
    return z, ld


def init_flow_params(key, d, hidden):
    half = d // 2
    k1, k2, k3, k4 = jax.random.split(key, 4)
    w1 = 0.1 * jax.random.normal(k1, (half, hidden), jnp.float32)
    b1 = 0.1 * jax.random.normal(k2, (1, hidden), jnp.float32)
    w2 = 0.1 * jax.random.normal(k3, (hidden, d), jnp.float32)   # outputs [s | t]
    b2 = 0.1 * jax.random.normal(k4, (1, d), jnp.float32)
    return (w1, b1, w2, b2)


def normalizing_flow_forward(x, all_params, *, store_dtype=jnp.bfloat16,
                             return_all_zs=True):
    """Mirrors NormalizingFlow.forward: returns (zs, log_det).

    Parameters / activations are stored in `store_dtype` (default bf16) with
    all accumulation in f32. Set return_all_zs=False to skip the intermediate
    z HBM writes (zs then contains only [x, z_final]).
    """
    m, d = x.shape
    half = d // 2
    n_flows = len(all_params)
    hidden = all_params[0][0].shape[1]

    half_p = _round_up(half, _LANE)
    hidden_p = _round_up(hidden, _LANE)
    d_p = 2 * half_p

    # Adaptive batch tiling: >= 2 tiles when possible (v7x megacore), multiple
    # of 8 sublanes, capped at 512 rows. Batch is zero-padded to whole tiles so
    # padded rows stay finite (no NaNs); they are sliced off below.
    tile_m = min(512, max(_SUBLANE, _round_up(pl.cdiv(m, 2), _SUBLANE)))
    m_p = _round_up(m, tile_m)

    # Layout plumbing (outside the kernel): stack per-flow params, zero-pad
    # half/hidden to lane width (zeros keep padded columns exactly zero through
    # every flow and contribute 0 to log_det), keep the fused [s | t] head split
    # at the 128-aligned boundary half_p, and cast storage to store_dtype.
    w1 = jnp.stack([p[0] for p in all_params]).astype(store_dtype)   # (F, half, hidden)
    b1 = jnp.stack([p[1] for p in all_params]).astype(store_dtype)   # (F, 1, hidden)
    w2 = jnp.stack([p[2] for p in all_params]).astype(store_dtype)   # (F, hidden, 2*half)
    b2 = jnp.stack([p[3] for p in all_params]).astype(store_dtype)   # (F, 1, 2*half)

    w1p = jnp.zeros((n_flows, half_p, hidden_p), store_dtype
                    ).at[:, :half, :hidden].set(w1)
    b1p = jnp.zeros((n_flows, 1, hidden_p), store_dtype
                    ).at[:, :, :hidden].set(b1)
    w2p = jnp.zeros((n_flows, hidden_p, d_p), store_dtype)
    w2p = w2p.at[:, :hidden, :half].set(w2[:, :, :half])
    w2p = w2p.at[:, :hidden, half_p:half_p + half].set(w2[:, :, half:])
    b2p = jnp.zeros((n_flows, 1, d_p), store_dtype)
    b2p = b2p.at[:, :, :half].set(b2[:, :, :half])
    b2p = b2p.at[:, :, half_p:half_p + half].set(b2[:, :, half:])

    xp = jnp.zeros((m_p, d_p), store_dtype)
    xp = xp.at[:m, :half].set(x[:, :half].astype(store_dtype))
    xp = xp.at[:m, half_p:half_p + half].set(x[:, half:].astype(store_dtype))

    z, ld = _fused_flows(xp, w1p, b1p, w2p, b2p, tile_m=tile_m,
                         store_all_z=return_all_zs)

    def unpack(zi):
        # When half is already a multiple of 128 this is a pure slice (no concat).
        if half == half_p:
            return zi[:m, :].astype(x.dtype)
        return jnp.concatenate(
            [zi[:m, :half], zi[:m, half_p:half_p + half]], axis=1
        ).astype(x.dtype)

    zs = [x] + [unpack(z[i]) for i in range(z.shape[0])]
    return zs, ld[:m, 0]


def reference_forward(x, all_params, store_dtype=jnp.float32):
    """Pure-JAX reference matching the PyTorch NormalizingFlow.forward semantics.

    Params / input are rounded to `store_dtype` (the kernel's storage dtype) and
    upcast to f32, so the comparison isolates kernel correctness from the
    deliberate storage-precision choice; math itself is f32 HIGHEST precision.
    """
    m, d = x.shape
    half = d // 2
    hp = jax.lax.Precision.HIGHEST
    q = lambda a: a.astype(store_dtype).astype(jnp.float32)
    xc = q(x)
    log_det = jnp.zeros((m,), jnp.float32)
    zs = [x]
    for i, (w1, b1, w2, b2) in enumerate(all_params):
        w1, b1, w2, b2 = q(w1), q(b1), q(w2), q(b2)
        swap = (i % 2 == 1)
        x0 = xc[:, half:] if swap else xc[:, :half]
        x1 = xc[:, :half] if swap else xc[:, half:]
        h = jnp.tanh(jnp.dot(x0, w1, precision=hp) + b1)
        st = jnp.dot(h, w2, precision=hp) + b2
        s, t = st[:, :half], st[:, half:]
        z1 = x1 * jnp.exp(s) + t
        xc = jnp.concatenate([z1, x0] if swap else [x0, z1], axis=1)
        log_det = log_det + jnp.sum(s, axis=1)
        zs.append(xc)
    return zs, log_det


if __name__ == "__main__":
    m, d, hidden, n_flows = 16, 8, 32, 4

    key = jax.random.PRNGKey(0)
    key, xkey = jax.random.split(key)
    x = jax.random.normal(xkey, (m, d), jnp.float32)

    flow_keys = jax.random.split(key, n_flows)
    all_params = [init_flow_params(flow_keys[i], d, hidden)
                  for i in range(n_flows)]

    zs, log_det = normalizing_flow_forward(x, all_params)
    jax.block_until_ready(zs[-1])
    jax.block_until_ready(log_det)

    # Tolerances cover the intentional bf16 storage (rel ~0.4%) on top of f32 math.
    zs_ref, ld_ref = reference_forward(x, all_params, store_dtype=jnp.bfloat16)
    for zp, zr in zip(zs, zs_ref):
        assert zp.shape == zr.shape
        assert jnp.allclose(zp, zr, atol=2e-2, rtol=2e-2), "z mismatch vs reference"
    assert jnp.allclose(log_det, ld_ref, atol=2e-2, rtol=2e-2), "log_det mismatch"

    # Final-z-only mode: skips the intermediate z HBM writes.
    zs_last, ld_last = normalizing_flow_forward(x, all_params, return_all_zs=False)
    jax.block_until_ready(zs_last[-1])
    assert len(zs_last) == 2
    assert jnp.allclose(zs_last[-1], zs_ref[-1], atol=2e-2, rtol=2e-2)
    assert jnp.allclose(ld_last, ld_ref, atol=2e-2, rtol=2e-2)

    assert len(zs) == n_flows + 1
    assert zs[-1].shape == (m, d)
    assert log_det.shape == (m,)
    # TODO(synk): NormalizingFlow.backward (inverse pass) is not implemented here;
    # only forward was requested.
    print("KERNEL_OK")
</pallas_src>

<mosaic_0001>
module attributes {stable_mosaic.version = 11 : i64} {
  func.func @kernel(%arg0: i32, %arg1: i32, %arg2: memref<8x256xbf16, #tpu.memory_space<vmem>>, %arg3: memref<4x128x128xbf16, #tpu.memory_space<vmem>>, %arg4: memref<4x1x128xbf16, #tpu.memory_space<vmem>>, %arg5: memref<4x128x256xbf16, #tpu.memory_space<vmem>>, %arg6: memref<4x1x256xbf16, #tpu.memory_space<vmem>>, %arg7: memref<1x8x256xbf16, #tpu.memory_space<vmem>>, %arg8: memref<8x1xf32, #tpu.memory_space<vmem>>, %arg9: memref<8x128xf32, #tpu.memory_space<vmem>>, %arg10: memref<8x128xf32, #tpu.memory_space<vmem>>, %arg11: memref<8x128xf32, #tpu.memory_space<vmem>>) attributes {dimension_semantics = [#tpu.dimension_semantics<parallel>, #tpu.dimension_semantics<arbitrary>], iteration_bounds = array<i64: 2, 4>, scalar_prefetch = 0 : i64, scratch_operands = 3 : i64, tpu.core_type = #tpu.core_type<tc>, window_params = [{transform_indices = @transform_0, window_bounds = array<i64: 8, 256>}, {pipeline_mode = #tpu.pipeline_mode<synchronous>, transform_indices = @transform_1, window_bounds = array<i64: 4, 128, 128>}, {pipeline_mode = #tpu.pipeline_mode<synchronous>, transform_indices = @transform_2, window_bounds = array<i64: 4, 1, 128>}, {pipeline_mode = #tpu.pipeline_mode<synchronous>, transform_indices = @transform_3, window_bounds = array<i64: 4, 128, 256>}, {pipeline_mode = #tpu.pipeline_mode<synchronous>, transform_indices = @transform_4, window_bounds = array<i64: 4, 1, 256>}, {transform_indices = @transform_5, window_bounds = array<i64: 1, 8, 256>}, {transform_indices = @transform_6, window_bounds = array<i64: 8, 1>}]} {
    %c2_i32 = arith.constant 2 : i32
    %c0_i32 = arith.constant 0 : i32
    %0 = arith.cmpi eq, %c2_i32, %c0_i32 : i32
    %c1_i32 = arith.constant 1 : i32
    %1 = arith.select %0, %c1_i32, %c2_i32 : i32
    %2 = arith.remsi %arg1, %1 : i32
    %c0_i32_0 = arith.constant 0 : i32
    %3 = arith.cmpi ne, %2, %c0_i32_0 : i32
    %c0_i32_1 = arith.constant 0 : i32
    %4 = arith.cmpi slt, %2, %c0_i32_1 : i32
    %c0_i32_2 = arith.constant 0 : i32
    %5 = arith.cmpi slt, %1, %c0_i32_2 : i32
    %6 = arith.xori %4, %5 : i1
    %7 = arith.andi %6, %3 : i1
    %8 = arith.addi %2, %1 : i32
    %9 = arith.select %7, %8, %2 : i32
    %c1_i32_3 = arith.constant 1 : i32
    %10 = arith.cmpi eq, %9, %c1_i32_3 : i32
    %c0_i32_4 = arith.constant 0 : i32
    %11 = arith.cmpi eq, %arg1, %c0_i32_4 : i32
    %12 = arith.extui %11 : i1 to i32
    %c0_i32_5 = arith.constant 0 : i32
    %13 = arith.cmpi ne, %12, %c0_i32_5 : i32
    scf.if %13 {
      %c0_36 = arith.constant 0 : index
      %c0_37 = arith.constant 0 : index
      %69 = vector.load %arg2[%c0_36, %c0_37] : memref<8x256xbf16, #tpu.memory_space<vmem>>, vector<8x128xbf16>
      %70 = arith.extf %69 : vector<8x128xbf16> to vector<8x128xf32>
      %c0_38 = arith.constant 0 : index
      %c0_39 = arith.constant 0 : index
      %71 = vector.load %arg9[%c0_38, %c0_39] : memref<8x128xf32, #tpu.memory_space<vmem>>, vector<8x128xf32>
      tpu.vector_store %arg9[%c0_38, %c0_39], %70 {strides = array<i32>} : memref<8x128xf32, #tpu.memory_space<vmem>>, vector<8x128xf32>,
      %c0_40 = arith.constant 0 : index
      %c128 = arith.constant 128 : index
      %72 = vector.load %arg2[%c0_40, %c128] : memref<8x256xbf16, #tpu.memory_space<vmem>>, vector<8x128xbf16>
      %73 = arith.extf %72 : vector<8x128xbf16> to vector<8x128xf32>
      %c0_41 = arith.constant 0 : index
      %c0_42 = arith.constant 0 : index
      %74 = vector.load %arg10[%c0_41, %c0_42] : memref<8x128xf32, #tpu.memory_space<vmem>>, vector<8x128xf32>
      tpu.vector_store %arg10[%c0_41, %c0_42], %73 {strides = array<i32>} : memref<8x128xf32, #tpu.memory_space<vmem>>, vector<8x128xf32>,
      %cst_43 = arith.constant 0.000000e+00 : f32
      %75 = vector.broadcast %cst_43 : f32 to vector<8x128xf32>
      %c0_44 = arith.constant 0 : index
      %c0_45 = arith.constant 0 : index
      %76 = vector.load %arg11[%c0_44, %c0_45] : memref<8x128xf32, #tpu.memory_space<vmem>>, vector<8x128xf32>
      tpu.vector_store %arg11[%c0_44, %c0_45], %75 {strides = array<i32>} : memref<8x128xf32, #tpu.memory_space<vmem>>, vector<8x128xf32>,
    } else {
    }
    %14 = arith.index_cast %arg1 : i32 to index
    %c0 = arith.constant 0 : index
    %c0_6 = arith.constant 0 : index
    %15 = vector.load %arg3[%14, %c0, %c0_6] : memref<4x128x128xbf16, #tpu.memory_space<vmem>>, vector<1x128x128xbf16>
    %16 = vector.shape_cast %15 : vector<1x128x128xbf16> to vector<128x128xbf16>
    %17 = arith.index_cast %arg1 : i32 to index
    %c0_7 = arith.constant 0 : index
    %c0_8 = arith.constant 0 : index
    %18 = vector.load %arg4[%17, %c0_7, %c0_8] : memref<4x1x128xbf16, #tpu.memory_space<vmem>>, vector<1x1x128xbf16>
    %19 = vector.shape_cast %18 : vector<1x1x128xbf16> to vector<1x128xbf16>
    %20 = arith.index_cast %arg1 : i32 to index
    %c0_9 = arith.constant 0 : index
    %c0_10 = arith.constant 0 : index
    %21 = vector.load %arg5[%20, %c0_9, %c0_10] : memref<4x128x256xbf16, #tpu.memory_space<vmem>>, vector<1x128x256xbf16>
    %22 = vector.shape_cast %21 : vector<1x128x256xbf16> to vector<128x256xbf16>
    %23 = arith.index_cast %arg1 : i32 to index
    %c0_11 = arith.constant 0 : index
    %c0_12 = arith.constant 0 : index
    %24 = vector.load %arg6[%23, %c0_11, %c0_12] : memref<4x1x256xbf16, #tpu.memory_space<vmem>>, vector<1x1x256xbf16>
    %25 = vector.shape_cast %24 : vector<1x1x256xbf16> to vector<1x256xbf16>
    %c0_13 = arith.constant 0 : index
    %c0_14 = arith.constant 0 : index
    %26 = vector.load %arg9[%c0_13, %c0_14] : memref<8x128xf32, #tpu.memory_space<vmem>>, vector<8x128xf32>
    %c0_15 = arith.constant 0 : index
    %c0_16 = arith.constant 0 : index
    %27 = vector.load %arg10[%c0_15, %c0_16] : memref<8x128xf32, #tpu.memory_space<vmem>>, vector<8x128xf32>
    %28 = arith.truncf %26 : vector<8x128xf32> to vector<8x128xbf16>
    %cst = arith.constant dense<0.000000e+00> : vector<8x128xf32>
    %29 = tpu.matmul %28, %16, %cst {dimension_numbers = #tpu.dot_dimension_numbers<[1], [0], [0], [1], [0, 0, 1, 1], [], []>} : vector<8x128xbf16>, vector<128x128xbf16>, vector<8x128xf32> -> vector<8x128xf32>
    %30 = arith.extf %19 : vector<1x128xbf16> to vector<1x128xf32>
    %31 = vector.broadcast %30 : vector<1x128xf32> to vector<8x128xf32>
    %32 = arith.addf %29, %31 : vector<8x128xf32>
    %33 = math.tanh %32 : vector<8x128xf32>
    %34 = arith.truncf %33 : vector<8x128xf32> to vector<8x128xbf16>
    %cst_17 = arith.constant dense<0.000000e+00> : vector<8x256xf32>
    %35 = tpu.matmul %34, %22, %cst_17 {dimension_numbers = #tpu.dot_dimension_numbers<[1], [0], [0], [1], [0, 0, 1, 1], [], []>} : vector<8x128xbf16>, vector<128x256xbf16>, vector<8x256xf32> -> vector<8x256xf32>
    %36 = arith.extf %25 : vector<1x256xbf16> to vector<1x256xf32>
    %37 = vector.broadcast %36 : vector<1x256xf32> to vector<8x256xf32>
    %38 = arith.addf %35, %37 : vector<8x256xf32>
    %39 = vector.extract_strided_slice %38 {offsets = [0, 0], sizes = [8, 128], strides = [1, 1]} : vector<8x256xf32> to vector<8x128xf32>
    %40 = vector.extract_strided_slice %38 {offsets = [0, 128], sizes = [8, 128], strides = [1, 1]} : vector<8x256xf32> to vector<8x128xf32>
    %41 = math.exp %39 : vector<8x128xf32>
    %42 = arith.mulf %27, %41 : vector<8x128xf32>
    %43 = arith.addf %42, %40 : vector<8x128xf32>
    %c0_18 = arith.constant 0 : index
    %c0_19 = arith.constant 0 : index
    %44 = vector.load %arg9[%c0_18, %c0_19] : memref<8x128xf32, #tpu.memory_space<vmem>>, vector<8x128xf32>
    tpu.vector_store %arg9[%c0_18, %c0_19], %43 {strides = array<i32>} : memref<8x128xf32, #tpu.memory_space<vmem>>, vector<8x128xf32>,
    %c0_20 = arith.constant 0 : index
    %c0_21 = arith.constant 0 : index
    %45 = vector.load %arg10[%c0_20, %c0_21] : memref<8x128xf32, #tpu.memory_space<vmem>>, vector<8x128xf32>
    tpu.vector_store %arg10[%c0_20, %c0_21], %26 {strides = array<i32>} : memref<8x128xf32, #tpu.memory_space<vmem>>, vector<8x128xf32>,
    %c0_22 = arith.constant 0 : index
    %c0_23 = arith.constant 0 : index
    %46 = vector.load %arg11[%c0_22, %c0_23] : memref<8x128xf32, #tpu.memory_space<vmem>>, vector<8x128xf32>
    %47 = arith.addf %46, %39 : vector<8x128xf32>
    %c0_24 = arith.constant 0 : index
    %c0_25 = arith.constant 0 : index
    %48 = vector.load %arg11[%c0_24, %c0_25] : memref<8x128xf32, #tpu.memory_space<vmem>>, vector<8x128xf32>
    tpu.vector_store %arg11[%c0_24, %c0_25], %47 {strides = array<i32>} : memref<8x128xf32, #tpu.memory_space<vmem>>, vector<8x128xf32>,
    %49 = arith.truncf %43 : vector<8x128xf32> to vector<8x128xbf16>
    %50 = arith.truncf %26 : vector<8x128xf32> to vector<8x128xbf16>
    %c2_i32_26 = arith.constant 2 : i32
    %c0_i32_27 = arith.constant 0 : i32
    %51 = arith.cmpi eq, %c2_i32_26, %c0_i32_27 : i32
    %c1_i32_28 = arith.constant 1 : i32
    %52 = arith.select %51, %c1_i32_28, %c2_i32_26 : i32
    %53 = arith.remsi %arg1, %52 : i32
    %c0_i32_29 = arith.constant 0 : i32
    %54 = arith.cmpi ne, %53, %c0_i32_29 : i32
    %c0_i32_30 = arith.constant 0 : i32
    %55 = arith.cmpi slt, %53, %c0_i32_30 : i32
    %c0_i32_31 = arith.constant 0 : i32
    %56 = arith.cmpi slt, %52, %c0_i32_31 : i32
    %57 = arith.xori %55, %56 : i1
    %58 = arith.andi %57, %54 : i1
    %59 = arith.addi %53, %52 : i32
    %60 = arith.select %58, %59, %53 : i32
    %c0_i32_32 = arith.constant 0 : i32
    %61 = arith.cmpi eq, %60, %c0_i32_32 : i32
    %62 = arith.extui %61 : i1 to i32
    %c0_i32_33 = arith.constant 0 : i32
    %63 = arith.cmpi ne, %62, %c0_i32_33 : i32
    scf.if %63 {
      %c0_36 = arith.constant 0 : index
      %c0_37 = arith.constant 0 : index
      %c0_38 = arith.constant 0 : index
      %69 = vector.load %arg7[%c0_36, %c0_37, %c0_38] : memref<1x8x256xbf16, #tpu.memory_space<vmem>>, vector<1x8x128xbf16>
      %70 = vector.shape_cast %69 : vector<1x8x128xbf16> to vector<8x128xbf16>
      %71 = vector.shape_cast %50 : vector<8x128xbf16> to vector<1x8x128xbf16>
      tpu.vector_store %arg7[%c0_36, %c0_37, %c0_38], %71 {strides = array<i32>} : memref<1x8x256xbf16, #tpu.memory_space<vmem>>, vector<1x8x128xbf16>,
      %c0_39 = arith.constant 0 : index
      %c0_40 = arith.constant 0 : index
      %c128 = arith.constant 128 : index
      %72 = vector.load %arg7[%c0_39, %c0_40, %c128] : memref<1x8x256xbf16, #tpu.memory_space<vmem>>, vector<1x8x128xbf16>
      %73 = vector.shape_cast %72 : vector<1x8x128xbf16> to vector<8x128xbf16>
      %74 = vector.shape_cast %49 : vector<8x128xbf16> to vector<1x8x128xbf16>
      tpu.vector_store %arg7[%c0_39, %c0_40, %c128], %74 {strides = array<i32>} : memref<1x8x256xbf16, #tpu.memory_space<vmem>>, vector<1x8x128xbf16>,
    } else {
    }
    %64 = arith.extui %10 : i1 to i32
    %c0_i32_34 = arith.constant 0 : i32
    %65 = arith.cmpi ne, %64, %c0_i32_34 : i32
    scf.if %65 {
      %c0_36 = arith.constant 0 : index
      %c0_37 = arith.constant 0 : index
      %c0_38 = arith.constant 0 : index
      %69 = vector.load %arg7[%c0_36, %c0_37, %c0_38] : memref<1x8x256xbf16, #tpu.memory_space<vmem>>, vector<1x8x128xbf16>
      %70 = vector.shape_cast %69 : vector<1x8x128xbf16> to vector<8x128xbf16>
      %71 = vector.shape_cast %49 : vector<8x128xbf16> to vector<1x8x128xbf16>
      tpu.vector_store %arg7[%c0_36, %c0_37, %c0_38], %71 {strides = array<i32>} : memref<1x8x256xbf16, #tpu.memory_space<vmem>>, vector<1x8x128xbf16>,
      %c0_39 = arith.constant 0 : index
      %c0_40 = arith.constant 0 : index
      %c128 = arith.constant 128 : index
      %72 = vector.load %arg7[%c0_39, %c0_40, %c128] : memref<1x8x256xbf16, #tpu.memory_space<vmem>>, vector<1x8x128xbf16>
      %73 = vector.shape_cast %72 : vector<1x8x128xbf16> to vector<8x128xbf16>
      %74 = vector.shape_cast %50 : vector<8x128xbf16> to vector<1x8x128xbf16>
      tpu.vector_store %arg7[%c0_39, %c0_40, %c128], %74 {strides = array<i32>} : memref<1x8x256xbf16, #tpu.memory_space<vmem>>, vector<1x8x128xbf16>,
    } else {
    }
    %c3_i32 = arith.constant 3 : i32
    %66 = arith.cmpi eq, %arg1, %c3_i32 : i32
    %67 = arith.extui %66 : i1 to i32
    %c0_i32_35 = arith.constant 0 : i32
    %68 = arith.cmpi ne, %67, %c0_i32_35 : i32
    scf.if %68 {
      %c0_36 = arith.constant 0 : index
      %c0_37 = arith.constant 0 : index
      %69 = vector.load %arg11[%c0_36, %c0_37] : memref<8x128xf32, #tpu.memory_space<vmem>>, vector<8x128xf32>
      %cst_38 = arith.constant dense<0.000000e+00> : vector<8xf32>
      %70 = vector.multi_reduction <add>, %69, %cst_38 [1] : vector<8x128xf32> to vector<8xf32>
      %71 = vector.shape_cast %70 : vector<8xf32> to vector<8x1xf32>
      %c0_39 = arith.constant 0 : index
      %c0_40 = arith.constant 0 : index
      %72 = vector.load %arg8[%c0_39, %c0_40] : memref<8x1xf32, #tpu.memory_space<vmem>>, vector<8x1xf32>
      tpu.vector_store %arg8[%c0_39, %c0_40], %71 {strides = array<i32>} : memref<8x1xf32, #tpu.memory_space<vmem>>, vector<8x1xf32>,
    } else {
    }
    return
  }
  func.func @transform_0(%arg0: i32, %arg1: i32) -> (i32, i32) {
    %c0_i32 = arith.constant 0 : i32
    %c0_i32_0 = arith.constant 0 : i32
    return %arg0, %c0_i32 : i32, i32
  }
  func.func @transform_1(%arg0: i32, %arg1: i32) -> (i32, i32, i32) {
    %c0_i32 = arith.constant 0 : i32
    %c0_i32_0 = arith.constant 0 : i32
    %c0_i32_1 = arith.constant 0 : i32
    %c0_i32_2 = arith.constant 0 : i32
    return %c0_i32, %c0_i32_0, %c0_i32_1 : i32, i32, i32
  }
  func.func @transform_2(%arg0: i32, %arg1: i32) -> (i32, i32, i32) {
    %c0_i32 = arith.constant 0 : i32
    %c0_i32_0 = arith.constant 0 : i32
    %c0_i32_1 = arith.constant 0 : i32
    %c0_i32_2 = arith.constant 0 : i32
    return %c0_i32, %c0_i32_0, %c0_i32_1 : i32, i32, i32
  }
  func.func @transform_3(%arg0: i32, %arg1: i32) -> (i32, i32, i32) {
    %c0_i32 = arith.constant 0 : i32
    %c0_i32_0 = arith.constant 0 : i32
    %c0_i32_1 = arith.constant 0 : i32
    %c0_i32_2 = arith.constant 0 : i32
    return %c0_i32, %c0_i32_0, %c0_i32_1 : i32, i32, i32
  }
  func.func @transform_4(%arg0: i32, %arg1: i32) -> (i32, i32, i32) {
    %c0_i32 = arith.constant 0 : i32
    %c0_i32_0 = arith.constant 0 : i32
    %c0_i32_1 = arith.constant 0 : i32
    %c0_i32_2 = arith.constant 0 : i32
    return %c0_i32, %c0_i32_0, %c0_i32_1 : i32, i32, i32
  }
  func.func @transform_5(%arg0: i32, %arg1: i32) -> (i32, i32, i32) {
    %c0_i32 = arith.constant 0 : i32
    %c0_i32_0 = arith.constant 0 : i32
    return %arg1, %arg0, %c0_i32 : i32, i32, i32
  }
  func.func @transform_6(%arg0: i32, %arg1: i32) -> (i32, i32) {
    %c0_i32 = arith.constant 0 : i32
    %c0_i32_0 = arith.constant 0 : i32
    return %arg0, %c0_i32 : i32, i32
  }
}

</mosaic_0001>

<llo_original>
// kernel: tpu_custom_call.1
$region0: #{tpu_custom_call.1}
  #allocation0 [shape = 'u32[]', space=smem, size = 0x4, offset = 0x4, fixed_abs, tag = 'smem constant byte address 0x4 - core index']
  #allocation1 [shape = 'u32[144,128]{1,0:T(1,128)}', space=vmem, size = 0x12000, scoped, tag = 'internal scratch']
  #allocation2 [shape = 'f32[8,128]{1,0:T(8,128)}', space=vmem, size = 0x1000, scoped, tag = 'scratch operand']
  #allocation3 [shape = 'f32[8,128]{1,0:T(8,128)}', space=vmem, size = 0x1000, scoped, tag = 'scratch operand']
  #allocation4 [shape = 'f32[8,128]{1,0:T(8,128)}', space=vmem, size = 0x1000, scoped, tag = 'scratch operand']
  %s0 = inlined_call_operand.vmem [shape: bf16[16,256], index: 0, kind: input, shape index: {}]
  %s1 = inlined_call_operand.hbm [shape: bf16[4,128,128], index: 1, kind: input, shape index: {}]
  %s2 = inlined_call_operand.vmem [shape: bf16[4,1,128], index: 2, kind: input, shape index: {}]
  %s3 = inlined_call_operand.hbm [shape: bf16[4,128,256], index: 3, kind: input, shape index: {}]
  %s4 = inlined_call_operand.vmem [shape: bf16[4,1,256], index: 4, kind: input, shape index: {}]
  %s5 = inlined_call_operand.hbm [shape: bf16[4,16,256], index: 5, kind: output, shape index: {0}]
  %s6 = inlined_call_operand.vmem [shape: f32[16,1], index: 6, kind: output, shape index: {1}]
  %7 = xla_tuple %s5, %s6
  %s8 = sld [smem:[#allocation0]]
  $region85: #{tpu_custom_call.1} parent=0
    _
  %s10 = ssub.s32 1, %s8
  %s11 = scalar_select 0, %s10, %s8
  $region1: #{tpu_custom_call.1} parent=0
    #allocation5 [shape = 'u8[131072]{0}', space=vmem, size = 0x20000, scoped, tag = 'input window, operand 1, single buffered']
    #allocation6 [shape = 's32[2]{0}', space=sflag, size = 0x8, scoped, tag = 'scoped memory for tpu_custom_call.1']
    #allocation7 [shape = 's32[2]{0}', space=sflag, size = 0x8, scoped, tag = 'scoped memory for tpu_custom_call.1']
    #allocation8 [shape = 'u8[262144]{0}', space=vmem, size = 0x40000, scoped, tag = 'input window, operand 3, single buffered']
    #allocation9 [shape = 's32[1]{0}', space=sflag, size = 0x4, scoped, tag = 'scoped memory for tpu_custom_call.1']
    #allocation10 [shape = 'u8[8192]{0}', space=vmem, size = 0x2000, scoped, tag = 'output window, operand 0']
    %12 = vsyncpa [#allocation6], 0
    %13 = vsyncpa [#allocation9], 0
    %14 = vsyncpa [#allocation7], 0
    %s15 = scalar_lea.sflag [#allocation7], 1
    %16 = vsyncpa %s15, 0
    loop: start=0, step=1, limit=10
    $region2: #{tpu_custom_call.1} parent=1 // loop_pre_header
      _
    $region3: #{tpu_custom_call.1} parent=1 // loop_header
      %s18 = sphi 0, %s22
      %p19 = scmp.ge.s32.totalorder %s18, 10
      %s25 = sphi 0, %s37
      %s26 = sphi 0, %s33
      %s27 = sphi 0, %s25
      %s28 = sphi 0, %s26
      %s29 = sphi 0, %s27
      %s30 = sphi 0, %s28
      %s40 = sphi 0, %s42
      %s43 = sphi 0, %s40
      %s44 = sphi 0, %s43
      %s60 = sphi 0, %s44
      %s64 = sphi 0, %s64
      %s66 = sphi 0, %s64
      %s67 = sphi 0, %s66
      %s81 = sphi 0, %s67
      %s85 = sphi 0, %s85
      %s87 = sphi 0, %s85
      %s88 = sphi 0, %s87
      %s102 = sphi 0, %s88
      %s106 = sphi 0, %s106
      %s108 = sphi 0, %s106
      %s109 = sphi 0, %s108
      %s123 = sphi 0, %s109
      %s127 = sphi 0, %s127
      %s129 = sphi 0, %s127
      %s130 = sphi 0, %s129
      %s144 = sphi 0, %s130
      %s152 = sphi 0, %s154
      %s155 = sphi 0, %s152
      %s156 = sphi 0, %s155
      %s172 = sphi 0, %s156
      %s178 = sphi 0, %s180
      %s181 = sphi 0, %s178
      %s182 = sphi 0, %s181
      %s198 = sphi 0, %s182
    $region4: #{tpu_custom_call.1} parent=1 // loop_header_branch
      %21 = sbr.rel (%p19) target = $region8
    $region5: #{tpu_custom_call.1} parent=1 // loop_body
      %s23 = ssub.s32 %s18, 1
      %s24 = ssub.s32 %s18, 2
      %s31 = sadd.s32 1, %s26
      %p32 = scmp.ge.s32.totalorder %s31, 4
      %s33 = scalar_select %p32, 0, %s31
      %s34 = sadd.s32 1, %s25
      %s35 = scalar_select %p32, %s34, %s25
      %p36 = scmp.ge.s32.totalorder %s35, 2
      %s37 = scalar_select %p36, 0, %s35
      %s38 = ssub.s32 %s25, %s37
      %p39 = scmp.eq.s32.totalorder %s38, 0
      %s41 = sadd.s32 %s40, 1
      %s42 = scalar_select %p39, %s40, %s41
      %p45 = pneg %p39
      %p46 = scmp.eq.s32.totalorder %s18, 7
      %p47 = por %p45, %p46
      %p48 = scmp.ne.s32.totalorder %s40, %s43
      %p49 = scmp.eq.s32.totalorder %s18, 0
      %p50 = por %p48, %p49
      %p51 = scmp.ne.s32.totalorder %s40, %s43
      %p52 = scmp.eq.s32.totalorder %s23, 7
      %p53 = por %p51, %p52
      %p54 = scmp.ne.s32.totalorder %s43, %s44
      %p55 = scmp.eq.s32.totalorder %s23, 0
      %p56 = por %p54, %p55
      %p57 = scmp.ne.s32.totalorder %s43, %s44
      %p58 = scmp.eq.s32.totalorder %s24, 7
      %p59 = por %p57, %p58
      %p61 = scmp.ne.s32.totalorder %s44, %s60
      %p62 = scmp.eq.s32.totalorder %s24, 0
      %p63 = por %p61, %p62
      %s65 = sadd.s32 %s64, 1
      %p68 = scmp.eq.s32.totalorder %s18, 7
      %p69 = scmp.ne.s32.totalorder %s64, %s66
      %p70 = scmp.eq.s32.totalorder %s18, 0
      %p71 = por %p69, %p70
      %p72 = scmp.ne.s32.totalorder %s64, %s66
      %p73 = scmp.eq.s32.totalorder %s23, 7
      %p74 = por %p72, %p73
      %p75 = scmp.ne.s32.totalorder %s66, %s67
      %p76 = scmp.eq.s32.totalorder %s23, 0
      %p77 = por %p75, %p76
      %p78 = scmp.ne.s32.totalorder %s66, %s67
      %p79 = scmp.eq.s32.totalorder %s24, 7
      %p80 = por %p78, %p79
      %p82 = scmp.ne.s32.totalorder %s67, %s81
      %p83 = scmp.eq.s32.totalorder %s24, 0
      %p84 = por %p82, %p83
      %s86 = sadd.s32 %s85, 1
      %p89 = scmp.eq.s32.totalorder %s18, 7
      %p90 = scmp.ne.s32.totalorder %s85, %s87
      %p91 = scmp.eq.s32.totalorder %s18, 0
      %p92 = por %p90, %p91
      %p93 = scmp.ne.s32.totalorder %s85, %s87
      %p94 = scmp.eq.s32.totalorder %s23, 7
      %p95 = por %p93, %p94
      %p96 = scmp.ne.s32.totalorder %s87, %s88
      %p97 = scmp.eq.s32.totalorder %s23, 0
      %p98 = por %p96, %p97
      %p99 = scmp.ne.s32.totalorder %s87, %s88
      %p100 = scmp.eq.s32.totalorder %s24, 7
      %p101 = por %p99, %p100
      %p103 = scmp.ne.s32.totalorder %s88, %s102
      %p104 = scmp.eq.s32.totalorder %s24, 0
      %p105 = por %p103, %p104
      %s107 = sadd.s32 %s106, 1
      %p110 = scmp.eq.s32.totalorder %s18, 7
      %p111 = scmp.ne.s32.totalorder %s106, %s108
      %p112 = scmp.eq.s32.totalorder %s18, 0
      %p113 = por %p111, %p112
      %p114 = scmp.ne.s32.totalorder %s106, %s108
      %p115 = scmp.eq.s32.totalorder %s23, 7
      %p116 = por %p114, %p115
      %p117 = scmp.ne.s32.totalorder %s108, %s109
      %p118 = scmp.eq.s32.totalorder %s23, 0
      %p119 = por %p117, %p118
      %p120 = scmp.ne.s32.totalorder %s108, %s109
      %p121 = scmp.eq.s32.totalorder %s24, 7
      %p122 = por %p120, %p121
      %p124 = scmp.ne.s32.totalorder %s109, %s123
      %p125 = scmp.eq.s32.totalorder %s24, 0
      %p126 = por %p124, %p125
      %s128 = sadd.s32 %s127, 1
      %p131 = scmp.eq.s32.totalorder %s18, 7
      %p132 = scmp.ne.s32.totalorder %s127, %s129
      %p133 = scmp.eq.s32.totalorder %s18, 0
      %p134 = por %p132, %p133
      %p135 = scmp.ne.s32.totalorder %s127, %s129
      %p136 = scmp.eq.s32.totalorder %s23, 7
      %p137 = por %p135, %p136
      %p138 = scmp.ne.s32.totalorder %s129, %s130
      %p139 = scmp.eq.s32.totalorder %s23, 0
      %p140 = por %p138, %p139
      %p141 = scmp.ne.s32.totalorder %s129, %s130
      %p142 = scmp.eq.s32.totalorder %s24, 7
      %p143 = por %p141, %p142
      %p145 = scmp.ne.s32.totalorder %s130, %s144
      %p146 = scmp.eq.s32.totalorder %s24, 0
      %p147 = por %p145, %p146
      %s148 = ssub.s32 %s26, %s33
      %s149 = ssub.s32 %s25, %s37
      %s150 = sor.u32 %s148, %s149
      %p151 = scmp.eq.s32.totalorder %s150, 0
      %s153 = sadd.s32 %s152, 1
      %s154 = scalar_select %p151, %s152, %s153
      %p157 = pneg %p151
      %p158 = scmp.eq.s32.totalorder %s18, 7
      %p159 = por %p157, %p158
      %p160 = scmp.ne.s32.totalorder %s152, %s155
      %p161 = scmp.eq.s32.totalorder %s18, 0
      %p162 = por %p160, %p161
      %p163 = scmp.ne.s32.totalorder %s152, %s155
      %p164 = scmp.eq.s32.totalorder %s23, 7
      %p165 = por %p163, %p164
      %p166 = scmp.ne.s32.totalorder %s155, %s156
      %p167 = scmp.eq.s32.totalorder %s23, 0
      %p168 = por %p166, %p167
      %p169 = scmp.ne.s32.totalorder %s155, %s156
      %p170 = scmp.eq.s32.totalorder %s24, 7
      %p171 = por %p169, %p170
      %p173 = scmp.ne.s32.totalorder %s156, %s172
      %p174 = scmp.eq.s32.totalorder %s24, 0
      %p175 = por %p173, %p174
      %s176 = ssub.s32 %s25, %s37
      %p177 = scmp.eq.s32.totalorder %s176, 0
      %s179 = sadd.s32 %s178, 1
      %s180 = scalar_select %p177, %s178, %s179
      %p183 = pneg %p177
      %p184 = scmp.eq.s32.totalorder %s18, 7
      %p185 = por %p183, %p184
      %p186 = scmp.ne.s32.totalorder %s178, %s181
      %p187 = scmp.eq.s32.totalorder %s18, 0
      %p188 = por %p186, %p187
      %p189 = scmp.ne.s32.totalorder %s178, %s181
      %p190 = scmp.eq.s32.totalorder %s23, 7
      %p191 = por %p189, %p190
      %p192 = scmp.ne.s32.totalorder %s181, %s182
      %p193 = scmp.eq.s32.totalorder %s23, 0
      %p194 = por %p192, %p193
      %p195 = scmp.ne.s32.totalorder %s181, %s182
      %p196 = scmp.eq.s32.totalorder %s24, 7
      %p197 = por %p195, %p196
      %p199 = scmp.ne.s32.totalorder %s182, %s198
      %p200 = scmp.eq.s32.totalorder %s24, 0
      %p201 = por %p199, %p200
      %p202 = scmp.le.s32.totalorder 1, %s18
      %p203 = scmp.lt.s32.totalorder %s18, 9
      %p204 = pnand %p202, %p203
      %p205 = pneg %p204
      // Predicated region
      $region9: #{tpu_custom_call.1} parent=5 // pred_check
        _
      $region10: #{tpu_custom_call.1} parent=5 // pred_check_branch
        %207 = sbr.rel (%p204) target = $region12
      $region11: #{tpu_custom_call.1} parent=5 // pred_region
        %s208 = ssub.s32 %s18, 1
        // Predicated region
        $region13: #{tpu_custom_call.1} parent=11 // pred_check
          %p209 = pneg %p77
        $region14: #{tpu_custom_call.1} parent=11 // pred_check_branch
          %211 = sbr.rel (%p209) target = $region16
        $region15: #{tpu_custom_call.1} parent=11 // pred_region
          %s213 = ssub.s32 4096, 4096
          %214 = vsyncadd [#allocation6], %s213
          %s215 = sshll.u32 [#allocation5], 4
          %s216 = int_to_ptr.vmem [resolvable:$true] %s215
          %221 = dma.hbm_to_vmem [thread:$0]  %s1, 4096, %s216, [#allocation6], 64, 64, 4
        $region16: #{tpu_custom_call.1} parent=11 // pred_fallthru
          _
        // Predicated region
        $region17: #{tpu_custom_call.1} parent=11 // pred_check
          %p222 = pneg %p98
        $region18: #{tpu_custom_call.1} parent=11 // pred_check_branch
          %224 = sbr.rel (%p222) target = $region20
        $region19: #{tpu_custom_call.1} parent=11 // pred_region
          _
        $region20: #{tpu_custom_call.1} parent=11 // pred_fallthru
          _
        // Predicated region
        $region21: #{tpu_custom_call.1} parent=11 // pred_check
          %p225 = pneg %p119
        $region22: #{tpu_custom_call.1} parent=11 // pred_check_branch
          %227 = sbr.rel (%p225) target = $region24
        $region23: #{tpu_custom_call.1} parent=11 // pred_region
          %s229 = ssub.s32 8192, 8192
          %230 = vsyncadd [#allocation9], %s229
          %s231 = sshll.u32 [#allocation8], 4
          %s232 = int_to_ptr.vmem [resolvable:$true] %s231
          %237 = dma.hbm_to_vmem [thread:$0]  %s3, 8192, %s232, [#allocation9], 128, 128, 8
        $region24: #{tpu_custom_call.1} parent=11 // pred_fallthru
          _
        // Predicated region
        $region25: #{tpu_custom_call.1} parent=11 // pred_check
          %p238 = pneg %p140
        $region26: #{tpu_custom_call.1} parent=11 // pred_check_branch
          %240 = sbr.rel (%p238) target = $region28
        $region27: #{tpu_custom_call.1} parent=11 // pred_region
          _
        $region28: #{tpu_custom_call.1} parent=11 // pred_fallthru
          _
      $region12: #{tpu_custom_call.1} parent=5 // pred_fallthru
        _
      %p241 = scmp.lt.s32.totalorder %s18, 8
      // Predicated region
      $region29: #{tpu_custom_call.1} parent=5 // pred_check
        %p242 = pneg %p241
      $region30: #{tpu_custom_call.1} parent=5 // pred_check_branch
        %244 = sbr.rel (%p242) target = $region32
      $region31: #{tpu_custom_call.1} parent=5 // pred_region
        // Predicated region
        $region33: #{tpu_custom_call.1} parent=31 // pred_check
          %p245 = pneg %p50
        $region34: #{tpu_custom_call.1} parent=31 // pred_check_branch
          %247 = sbr.rel (%p245) target = $region36
        $region35: #{tpu_custom_call.1} parent=31 // pred_region
          %p248 = scmp.lt.s32.totalorder %s25, 1
          %s249 = scalar_select %p248, %s25, 1
          %s250 = smul.addr %s249, 2
          %s251 = smul.addr %s250, 4
          %s252 = scalar_lea.vmem %s0, %s251
        $region36: #{tpu_custom_call.1} parent=31 // pred_fallthru
          _
      $region32: #{tpu_custom_call.1} parent=5 // pred_fallthru
        _
      %p253 = scmp.le.s32.totalorder 1, %s18
      %p254 = scmp.lt.s32.totalorder %s18, 9
      %p255 = pnand %p253, %p254
      %p256 = pneg %p255
      // Predicated region
      $region37: #{tpu_custom_call.1} parent=5 // pred_check
        _
      $region38: #{tpu_custom_call.1} parent=5 // pred_check_branch
        %258 = sbr.rel (%p255) target = $region40
      $region39: #{tpu_custom_call.1} parent=5 // pred_region
        %s259 = ssub.s32 %s18, 1
        // Predicated region
        $region41: #{tpu_custom_call.1} parent=39 // pred_check
          %p260 = pneg %p77
        $region42: #{tpu_custom_call.1} parent=39 // pred_check_branch
          %262 = sbr.rel (%p260) target = $region44
        $region43: #{tpu_custom_call.1} parent=39 // pred_region
          %263 = dma.done [#allocation6], 4096
        $region44: #{tpu_custom_call.1} parent=39 // pred_fallthru
          _
        // Predicated region
        $region45: #{tpu_custom_call.1} parent=39 // pred_check
          %p264 = pneg %p119
        $region46: #{tpu_custom_call.1} parent=39 // pred_check_branch
          %266 = sbr.rel (%p264) target = $region48
        $region47: #{tpu_custom_call.1} parent=39 // pred_region
          %267 = dma.done [#allocation9], 8192
        $region48: #{tpu_custom_call.1} parent=39 // pred_fallthru
          _
        %p268 = scmp.lt.s32.totalorder %s27, 1
        %s269 = scalar_select %p268, %s27, 1
        %s270 = smul.addr %s269, 2
        %s271 = smul.addr %s270, 4
        %s272 = scalar_lea.vmem %s0, %s271
        %p273 = pneg %p56
        %p274 = pneg %p53
        %p275 = pneg %p77
        %p276 = pneg %p74
        %p277 = pneg %p98
        %p278 = pneg %p95
        %p279 = pneg %p119
        %p280 = pneg %p116
        %p281 = pneg %p140
        %p282 = pneg %p137
        %p283 = pneg %p168
        %p284 = pneg %p165
        %s285 = sand.u32 %s155, 1
        %s286 = scalar_lea.sflag [#allocation7], %s285
        %s287 = sand.u32 %s155, 1
        %s288 = smul.addr %s287, 8
        %s289 = scalar_lea.vmem [#allocation10], %s288
        %p290 = pneg %p194
        %p291 = pneg %p191
        %p292 = scmp.lt.s32.totalorder %s27, 1
        %s293 = scalar_select %p292, %s27, 1
        %s294 = smul.addr %s293, 8
        %s295 = scalar_lea.vmem %s6, %s294
        %p296 = scmp.lt.s32.totalorder %s27, 1
        %s297 = scalar_select %p296, %s27, 1
        %s298 = smul.addr %s297, 2
        %s299 = smul.addr %s298, 4
        %s300 = scalar_lea.vmem %s0, %s299
        %p301 = scmp.lt.s32.totalorder %s27, 1
        %s302 = scalar_select %p301, %s27, 1
        %s303 = smul.addr %s302, 8
        %s304 = scalar_lea.vmem %s6, %s303
        %p306 = scmp.lt.s32.totalorder %s28, 0
        %s307 = ssub.s32 0, %s28
        %s308 = scalar_select %p306, %s307, %s28
        %s309 = sand.u32 %s308, 1
        %s310 = ssub.s32 0, %s309
        %s311 = scalar_select %p306, %s310, %s309
        %p312 = scmp.ne.s32.totalorder %s311, 0
        %p313 = scmp.lt.s32.totalorder %s311, 0
        %p314 = pnand %p313, %p312
        %p315 = pneg %p314
        %s316 = sadd.s32 %s311, 2
        %s317 = scalar_select %p315, %s316, %s311
        %p318 = scmp.eq.s32.totalorder %s317, 1
        %p319 = scmp.eq.s32.totalorder %s28, 0
        // Predicated region
        $region49: #{tpu_custom_call.1} parent=39 // pred_check
          %p320 = pneg %p319
        $region50: #{tpu_custom_call.1} parent=39 // pred_check_branch
          %322 = sbr.rel (%p320) target = $region52
        $region51: #{tpu_custom_call.1} parent=39 // pred_region
          %v323 = vld [vmem:[%s300] sm:$0xf]
          %v324 = vunpack.c.l.bf16 %v323
          %325 = vst [vmem:[#allocation2] sm:$0xff] %v324
          %v326 = vld [vmem:[%s300 + $0x4] sm:$0xf]
          %v327 = vunpack.c.l.bf16 %v326
          %328 = vst [vmem:[#allocation3] sm:$0xff] %v327
          %329 = vst [vmem:[#allocation4] sm:$0xff] 0.0
        $region52: #{tpu_custom_call.1} parent=39 // pred_fallthru
          _
        %s330 = smul.u32 %s28, 16
        %s331 = smul.addr %s330, 4
        %s332 = scalar_lea.vmem [#allocation5], %s331
        %v333 = vld [vmem:[%s332] sm:$0xf]
        %v334 = vld [vmem:[%s332 + $0x4] sm:$0xf]
        %v335 = vld [vmem:[%s332 + $0x8] sm:$0xf]
        %v336 = vld [vmem:[%s332 + $0xc] sm:$0xf]
        %v337 = vld [vmem:[%s332 + $0x10] sm:$0xf]
        %v338 = vld [vmem:[%s332 + $0x14] sm:$0xf]
        %v339 = vld [vmem:[%s332 + $0x18] sm:$0xf]
        %v340 = vld [vmem:[%s332 + $0x1c] sm:$0xf]
        %v341 = vld [vmem:[%s332 + $0x20] sm:$0xf]
        %v342 = vld [vmem:[%s332 + $0x24] sm:$0xf]
        %v343 = vld [vmem:[%s332 + $0x28] sm:$0xf]
        %v344 = vld [vmem:[%s332 + $0x2c] sm:$0xf]
        %v345 = vld [vmem:[%s332 + $0x30] sm:$0xf]
        %v346 = vld [vmem:[%s332 + $0x34] sm:$0xf]
        %v347 = vld [vmem:[%s332 + $0x38] sm:$0xf]
        %v348 = vld [vmem:[%s332 + $0x3c] sm:$0xf]
        %s349 = scalar_lea.vmem %s2, %s28
        %v350 = vld [vmem:[%s349] sm:$0x1]
        %s351 = smul.u32 %s28, 32
        %s352 = smul.addr %s351, 4
        %s353 = scalar_lea.vmem [#allocation8], %s352
        %v354 = vld [vmem:[%s353] sm:$0xff]
        %v355 = vld [vmem:[%s353 + $0x8] sm:$0xff]
        %v356 = vld [vmem:[%s353 + $0x10] sm:$0xff]
        %v357 = vld [vmem:[%s353 + $0x18] sm:$0xff]
        %v358 = vld [vmem:[%s353 + $0x20] sm:$0xff]
        %v359 = vld [vmem:[%s353 + $0x28] sm:$0xff]
        %v360 = vld [vmem:[%s353 + $0x30] sm:$0xff]
        %v361 = vld [vmem:[%s353 + $0x38] sm:$0xff]
        %v362 = vld [vmem:[%s353 + $0x40] sm:$0xff]
        %v363 = vld [vmem:[%s353 + $0x48] sm:$0xff]
        %v364 = vld [vmem:[%s353 + $0x50] sm:$0xff]
        %v365 = vld [vmem:[%s353 + $0x58] sm:$0xff]
        %v366 = vld [vmem:[%s353 + $0x60] sm:$0xff]
        %v367 = vld [vmem:[%s353 + $0x68] sm:$0xff]
        %v368 = vld [vmem:[%s353 + $0x70] sm:$0xff]
        %v369 = vld [vmem:[%s353 + $0x78] sm:$0xff]
        %s370 = smul.u32 %s28, 2
        %s371 = scalar_lea.vmem %s4, %s370
        %v372 = vld [vmem:[%s371] sm:$0x3]
        %v373 = vld [vmem:[#allocation2] sm:$0xff]
        %v374 = vld [vmem:[#allocation3] sm:$0xff]
        %v375 = vpack.c.bf16 %v373, %v373
        %v376 = vunpack.c.l.bf16 %v350
        %v377 = vlaneseq
        %v378 = vshrl.u32 %v377, 7
        %v379 = vsub.s32 0, %v378
        %v380 = vrot.slane %v376, %v379
        %v397 = vunpack.c.l.b16 %v333
        %v398 = vunpack.c.l.b16 %v334
        %v399 = vunpack.c.l.b16 %v335
        %v400 = vunpack.c.l.b16 %v336
        %v401 = vunpack.c.l.b16 %v337
        %v402 = vunpack.c.l.b16 %v338
        %v403 = vunpack.c.l.b16 %v339
        %v404 = vunpack.c.l.b16 %v340
        %v405 = vunpack.c.l.b16 %v341
        %v406 = vunpack.c.l.b16 %v342
        %v407 = vunpack.c.l.b16 %v343
        %v408 = vunpack.c.l.b16 %v344
        %v409 = vunpack.c.l.b16 %v345
        %v410 = vunpack.c.l.b16 %v346
        %v411 = vunpack.c.l.b16 %v347
        %v412 = vunpack.c.l.b16 %v348
        %v413 = vpack.c.b16 %v398, %v397
        %v414 = vpack.c.b16 %v400, %v399
        %v415 = vpack.c.b16 %v402, %v401
        %v416 = vpack.c.b16 %v404, %v403
        %v417 = vpack.c.b16 %v406, %v405
        %v418 = vpack.c.b16 %v408, %v407
        %v419 = vpack.c.b16 %v410, %v409
        %v420 = vpack.c.b16 %v412, %v411
        %429 = vmatprep.subr.bf16.mxu0 0
        %430 = vmatpush1.bf16.msra.mxu0 %v413
        %431 = vmatprep.subr.bf16.mxu0 0
        %432 = vmatpush1.bf16.msra.mxu0 %v414
        %433 = vmatprep.subr.bf16.mxu0 0
        %434 = vmatpush1.bf16.msra.mxu0 %v415
        %435 = vmatprep.subr.bf16.mxu0 0
        %436 = vmatpush1.bf16.msra.mxu0 %v416
        %437 = vmatprep.subr.bf16.mxu0 0
        %438 = vmatpush1.bf16.msra.mxu0 %v417
        %439 = vmatprep.subr.bf16.mxu0 0
        %440 = vmatpush1.bf16.msra.mxu0 %v418
        %441 = vmatprep.subr.bf16.mxu0 0
        %442 = vmatpush1.bf16.msra.mxu0 %v419
        %443 = vmatprep.subr.bf16.mxu0 0
        %444 = vmatpush1.bf16.msra.mxu0 %v420
        %445 = vmatprep.subr.bf16.mxu0 0
        %446 = vmatpush1.bf16.msra.mxu0 0
        %447 = vmatprep.subr.bf16.mxu0 0
        %448 = vmatpush1.bf16.msra.mxu0 0
        %449 = vmatprep.subr.bf16.mxu0 0
        %450 = vmatpush1.bf16.msra.mxu0 0
        %451 = vmatprep.subr.bf16.mxu0 0
        %452 = vmatpush1.bf16.msra.mxu0 0
        %453 = vmatprep.subr.bf16.mxu0 0
        %454 = vmatpush1.bf16.msra.mxu0 0
        %455 = vmatprep.subr.bf16.mxu0 0
        %456 = vmatpush1.bf16.msra.mxu0 0
        %457 = vmatprep.subr.bf16.mxu0 0
        %458 = vmatpush1.bf16.msra.mxu0 0
        %459 = vmatprep.subr.bf16.mxu0 0
        %460 = vmatpush1.bf16.msra.mxu0 0
        %461 = vmatprep.mubr.bf16.mxu0 0
        %462 = vmatmul.mubr.bf16.gmra.mrb[0].mxu0 %v375
        %v463 = vpop.f32.mrb[0].mxu0
        %v464 = vadd.f32 %v380, %v463
        %v465 = vpop.f32.mrb[0].mxu0
        %v466 = vpop.f32.mrb[0].mxu0
        %v467 = vpop.f32.mrb[0].mxu0
        %468 = vdwg.mxu0
        %v469 = vtanh.pop %v464
        %v470 = vpack.c.bf16 %v469, %v469
        %v471 = vunpack.c.l.bf16 %v372
        %v473 = vlaneseq
        %v474 = vshrl.u32 %v473, 7
        %v475 = vsub.s32 0, %v474
        %v476 = vrot.slane %v471, %v475
        %v477 = vlaneseq
        %v478 = vshrl.u32 %v477, 7
        %v479 = vsub.s32 2, %v478
        %v480 = vrot.slane %v471, %v479
        %v483 = vlaneseq
        %v484 = vshrl.u32 %v483, 7
        %v485 = vsub.s32 0, %v484
        %v486 = vrot.slane %v476, %v485
        %v487 = vlaneseq
        %v488 = vshrl.u32 %v487, 7
        %v489 = vsub.s32 0, %v488
        %v490 = vrot.slane %v480, %v489
        %v507 = vunpack.c.l.b16 %v354
        %v508 = vunpack.c.h.b16 %v354
        %v509 = vunpack.c.l.b16 %v355
        %v510 = vunpack.c.h.b16 %v355
        %v511 = vunpack.c.l.b16 %v356
        %v512 = vunpack.c.h.b16 %v356
        %v513 = vunpack.c.l.b16 %v357
        %v514 = vunpack.c.h.b16 %v357
        %v515 = vunpack.c.l.b16 %v358
        %v516 = vunpack.c.h.b16 %v358
        %v517 = vunpack.c.l.b16 %v359
        %v518 = vunpack.c.h.b16 %v359
        %v519 = vunpack.c.l.b16 %v360
        %v520 = vunpack.c.h.b16 %v360
        %v521 = vunpack.c.l.b16 %v361
        %v522 = vunpack.c.h.b16 %v361
        %v523 = vunpack.c.l.b16 %v362
        %v524 = vunpack.c.h.b16 %v362
        %v525 = vunpack.c.l.b16 %v363
        %v526 = vunpack.c.h.b16 %v363
        %v527 = vunpack.c.l.b16 %v364
        %v528 = vunpack.c.h.b16 %v364
        %v529 = vunpack.c.l.b16 %v365
        %v530 = vunpack.c.h.b16 %v365
        %v531 = vunpack.c.l.b16 %v366
        %v532 = vunpack.c.h.b16 %v366
        %v533 = vunpack.c.l.b16 %v367
        %v534 = vunpack.c.h.b16 %v367
        %v535 = vunpack.c.l.b16 %v368
        %v536 = vunpack.c.h.b16 %v368
        %v537 = vunpack.c.l.b16 %v369
        %v538 = vunpack.c.h.b16 %v369
        %v539 = vpack.c.b16 %v509, %v507
        %v540 = vpack.c.b16 %v510, %v508
        %v541 = vpack.c.b16 %v513, %v511
        %v542 = vpack.c.b16 %v514, %v512
        %v543 = vpack.c.b16 %v517, %v515
        %v544 = vpack.c.b16 %v518, %v516
        %v545 = vpack.c.b16 %v521, %v519
        %v546 = vpack.c.b16 %v522, %v520
        %v547 = vpack.c.b16 %v525, %v523
        %v548 = vpack.c.b16 %v526, %v524
        %v549 = vpack.c.b16 %v529, %v527
        %v550 = vpack.c.b16 %v530, %v528
        %v551 = vpack.c.b16 %v533, %v531
        %v552 = vpack.c.b16 %v534, %v532
        %v553 = vpack.c.b16 %v537, %v535
        %v554 = vpack.c.b16 %v538, %v536
        %571 = vmatprep.subr.bf16.mxu0 %v540
        %572 = vmatpush1.bf16.msra.mxu0 %v539
        %573 = vmatprep.subr.bf16.mxu0 %v542
        %574 = vmatpush1.bf16.msra.mxu0 %v541
        %575 = vmatprep.subr.bf16.mxu0 %v544
        %576 = vmatpush1.bf16.msra.mxu0 %v543
        %577 = vmatprep.subr.bf16.mxu0 %v546
        %578 = vmatpush1.bf16.msra.mxu0 %v545
        %579 = vmatprep.subr.bf16.mxu0 %v548
        %580 = vmatpush1.bf16.msra.mxu0 %v547
        %581 = vmatprep.subr.bf16.mxu0 %v550
        %582 = vmatpush1.bf16.msra.mxu0 %v549
        %583 = vmatprep.subr.bf16.mxu0 %v552
        %584 = vmatpush1.bf16.msra.mxu0 %v551
        %585 = vmatprep.subr.bf16.mxu0 %v554
        %586 = vmatpush1.bf16.msra.mxu0 %v553
        %587 = vmatprep.subr.bf16.mxu0 0
        %588 = vmatpush1.bf16.msra.mxu0 0
        %589 = vmatprep.subr.bf16.mxu0 0
        %590 = vmatpush1.bf16.msra.mxu0 0
        %591 = vmatprep.subr.bf16.mxu0 0
        %592 = vmatpush1.bf16.msra.mxu0 0
        %593 = vmatprep.subr.bf16.mxu0 0
        %594 = vmatpush1.bf16.msra.mxu0 0
        %595 = vmatprep.subr.bf16.mxu0 0
        %596 = vmatpush1.bf16.msra.mxu0 0
        %597 = vmatprep.subr.bf16.mxu0 0
        %598 = vmatpush1.bf16.msra.mxu0 0
        %599 = vmatprep.subr.bf16.mxu0 0
        %600 = vmatpush1.bf16.msra.mxu0 0
        %601 = vmatprep.subr.bf16.mxu0 0
        %602 = vmatpush1.bf16.msra.mxu0 0
        %603 = vmatprep.mubr.bf16.mxu0 0
        %604 = vmatmul.mubr.bf16.gmra.mrb[0].mxu0 %v470
        %v605 = vpop.f32.mrb[0].mxu0
        %v606 = vadd.f32 %v486, %v605
        %v607 = vpop.f32.mrb[0].mxu0
        %v608 = vadd.f32 %v490, %v607
        %v609 = vpop.f32.mrb[0].mxu0
        %v610 = vpop.f32.mrb[0].mxu0
        %611 = vdwg.mxu0
        %v612 = vmul.f32 %v606, 1.442695
        %v613 = vpow.pop %v612
        %v614 = vmul.f32 %v374, %v613
        %v615 = vadd.f32 %v614, %v608
        %616 = vst [vmem:[#allocation2] sm:$0xff] %v615
        %617 = vst [vmem:[#allocation3] sm:$0xff] %v373
        %v618 = vld [vmem:[#allocation4] sm:$0xff]
        %v619 = vadd.f32 %v618, %v606
        %620 = vst [vmem:[#allocation4] sm:$0xff] %v619
        %v621 = vpack.c.bf16 %v615, %v615
        %p622 = scmp.eq.s32.totalorder %s317, 0
        // Predicated region
        $region53: #{tpu_custom_call.1} parent=39 // pred_check
          %p623 = pneg %p622
        $region54: #{tpu_custom_call.1} parent=39 // pred_check_branch
          %625 = sbr.rel (%p623) target = $region56
        $region55: #{tpu_custom_call.1} parent=39 // pred_region
          %626 = vst [vmem:[%s289] sm:$0xf] %v375
          %627 = vst [vmem:[%s289 + $0x4] sm:$0xf] %v621
        $region56: #{tpu_custom_call.1} parent=39 // pred_fallthru
          _
        // Predicated region
        $region57: #{tpu_custom_call.1} parent=39 // pred_check
          %p628 = pneg %p318
        $region58: #{tpu_custom_call.1} parent=39 // pred_check_branch
          %630 = sbr.rel (%p628) target = $region60
        $region59: #{tpu_custom_call.1} parent=39 // pred_region
          %631 = vst [vmem:[%s289] sm:$0xf] %v621
          %632 = vst [vmem:[%s289 + $0x4] sm:$0xf] %v375
        $region60: #{tpu_custom_call.1} parent=39 // pred_fallthru
          _
        %p633 = scmp.eq.s32.totalorder %s28, 3
        // Predicated region
        $region61: #{tpu_custom_call.1} parent=39 // pred_check
          %p634 = pneg %p633
        $region62: #{tpu_custom_call.1} parent=39 // pred_check_branch
          %636 = sbr.rel (%p634) target = $region64
        $region63: #{tpu_custom_call.1} parent=39 // pred_region
          %v637 = vld [vmem:[#allocation4] sm:$0xff]
          %638 = vadd.xlane.f32.xlu0 %v637
          %v639 = vpop.xlane.xlu0 %638
          %vm640 = vcmask 7168
          %641 = vst.msk [vmem:[%s304] sm:$0xff] %vm640, %v639
        $region64: #{tpu_custom_call.1} parent=39 // pred_fallthru
          _
        %s642 = sand.u32 %s155, 1
        %s643 = scalar_lea.sflag [#allocation7], %s642
        %s644 = sand.u32 %s155, 1
        %s645 = smul.addr %s644, 8
        %s646 = scalar_lea.vmem [#allocation10], %s645
        %p647 = scmp.lt.s32.totalorder %s27, 1
        %s648 = scalar_select %p647, %s27, 1
        %s649 = smul.addr %s648, 8
        %s650 = scalar_lea.vmem %s6, %s649
        // Predicated region
        $region65: #{tpu_custom_call.1} parent=39 // pred_check
          %p651 = pneg %p165
        $region66: #{tpu_custom_call.1} parent=39 // pred_check_branch
          %653 = sbr.rel (%p651) target = $region68
        $region67: #{tpu_custom_call.1} parent=39 // pred_region
          %s655 = ssub.s32 128, 128
          %656 = vsyncadd %s643, %s655
          %s657 = smul.addr %s27, 2
          %s658 = smul.addr %s28, 4
          %s659 = sadd.s32 %s657, %s658
          %s660 = smul.addr %s659, 64
          %s661 = scalar_lea.hbm %s5, %s660
          %s663 = sshll.u32 %s646, 4
          %s664 = int_to_ptr.vmem [resolvable:$true] %s663
          %666 = dma.vmem_to_hbm [thread:$0]  %s664, 128, %s661, %s643
        $region68: #{tpu_custom_call.1} parent=39 // pred_fallthru
          _
        // Predicated region
        $region69: #{tpu_custom_call.1} parent=39 // pred_check
          %p667 = pneg %p191
        $region70: #{tpu_custom_call.1} parent=39 // pred_check_branch
          %669 = sbr.rel (%p667) target = $region72
        $region71: #{tpu_custom_call.1} parent=39 // pred_region
          _
        $region72: #{tpu_custom_call.1} parent=39 // pred_fallthru
          _
      $region40: #{tpu_custom_call.1} parent=5 // pred_fallthru
        _
      %p670 = scmp.le.s32.totalorder 2, %s18
      // Predicated region
      $region73: #{tpu_custom_call.1} parent=5 // pred_check
        %p671 = pneg %p670
      $region74: #{tpu_custom_call.1} parent=5 // pred_check_branch
        %673 = sbr.rel (%p671) target = $region76
      $region75: #{tpu_custom_call.1} parent=5 // pred_region
        %s674 = ssub.s32 %s18, 2
        // Predicated region
        $region77: #{tpu_custom_call.1} parent=75 // pred_check
          %p675 = pneg %p171
        $region78: #{tpu_custom_call.1} parent=75 // pred_check_branch
          %677 = sbr.rel (%p675) target = $region80
        $region79: #{tpu_custom_call.1} parent=75 // pred_region
          %s678 = sand.u32 %s156, 1
          %s679 = scalar_lea.sflag [#allocation7], %s678
          %s680 = sand.u32 %s156, 1
          %s681 = smul.addr %s680, 8
          %s682 = scalar_lea.vmem [#allocation10], %s681
          %683 = dma.done %s679, 128
        $region80: #{tpu_custom_call.1} parent=75 // pred_fallthru
          _
        // Predicated region
        $region81: #{tpu_custom_call.1} parent=75 // pred_check
          %p684 = pneg %p197
        $region82: #{tpu_custom_call.1} parent=75 // pred_check_branch
          %686 = sbr.rel (%p684) target = $region84
        $region83: #{tpu_custom_call.1} parent=75 // pred_region
          %p687 = scmp.lt.s32.totalorder %s29, 1
          %s688 = scalar_select %p687, %s29, 1
          %s689 = smul.addr %s688, 8
          %s690 = scalar_lea.vmem %s6, %s689
        $region84: #{tpu_custom_call.1} parent=75 // pred_fallthru
          _
      $region76: #{tpu_custom_call.1} parent=5 // pred_fallthru
        _
    $region6: #{tpu_custom_call.1} parent=1 // loop_footer
      %s22 = sadd.s32 1, %s18
    $region7: #{tpu_custom_call.1} parent=1 // loop_footer_branch
      %17 = sbr.rel target = $region3
    $region8: #{tpu_custom_call.1} parent=1 // loop_exit
      _
    %691 = vsyncpa [#allocation6], 1
    %s692 = scalar_lea.sflag [#allocation6], 1
    %693 = vsyncpa %s692, 1
    %694 = vsyncpa [#allocation9], 1
    %695 = vsyncpa [#allocation7], 1
    %s696 = scalar_lea.sflag [#allocation7], 1
    %697 = vsyncpa %s696, 1

</llo_original>
